<compile_context>
chip_gen: v7x
topology: tpu7x:2x2x1
jax: 0.10.0
libtpu: 0.0.40
codegen_flags: <defaults>
</compile_context>

<pallas_src>
import jax
import jax.numpy as jnp
from jax.experimental import pallas as pl
from jax.experimental.pallas import tpu as pltpu

D_IN, D1, D2, D3, D_OUT = 30, 23, 15, 8, 1


def mlp_kernel(x_ref,
               w1_ref, b1_ref,
               w2_ref, b2_ref,
               w3_ref, b3_ref,
               w4_ref, b4_ref,
               o_ref):
    x = x_ref[...]                                                # (TM, 30) bf16

    h = jnp.dot(x, w1_ref[...], preferred_element_type=jnp.float32)
    h = jnp.maximum(h + b1_ref[...], 0.0)                         # (TM, 23) f32

    h = jnp.dot(h.astype(jnp.bfloat16), w2_ref[...],
                preferred_element_type=jnp.float32)
    h = jnp.maximum(h + b2_ref[...], 0.0)                         # (TM, 15) f32

    h = jnp.dot(h.astype(jnp.bfloat16), w3_ref[...],
                preferred_element_type=jnp.float32)
    h = jnp.maximum(h + b3_ref[...], 0.0)                         # (TM, 8)  f32

    # fc4 has a 1-wide output: VPU multiply + lane reduce (XLU) instead of
    # wasting an MXU pass on N=1.
    o = jnp.sum(h * w4_ref[...], axis=-1, keepdims=True) + b4_ref[...]
    o_ref[...] = o.astype(o_ref.dtype)                            # (TM, 1)


def _round_up(n, m):
    return ((n + m - 1) // m) * m


def net_forward(x, params, *, tm=512):
    """x: (B, 30) f32; params: dict w1..w4 (in,out layout), b1..b4 ((1,out))."""
    B = x.shape[0]
    TM = min(tm, _round_up(B, 8))           # row tile, multiple of 8 sublanes
    Bp = _round_up(B, TM)
    n_tiles = Bp // TM

    bf16 = jnp.bfloat16
    xp = x.astype(bf16)
    if Bp != B:
        xp = jnp.pad(xp, ((0, Bp - B), (0, 0)))

    w1 = params["w1"].astype(bf16)
    w2 = params["w2"].astype(bf16)
    w3 = params["w3"].astype(bf16)
    w4_row = jnp.transpose(params["w4"]).astype(jnp.float32)      # (1, 8) f32
    b1, b2, b3, b4 = params["b1"], params["b2"], params["b3"], params["b4"]

    # Weights/biases: full-array blocks with constant index_map -> DMA'd once,
    # VMEM-resident for every grid step.
    const = lambda a: pl.BlockSpec(a.shape, lambda i: (0,) * a.ndim)

    flops = 2 * Bp * (D_IN * D1 + D1 * D2 + D2 * D3 + D3 * D_OUT)
    bytes_accessed = (Bp * (D_IN * 2 + D_OUT * 4)
                      + sum(int(a.size) * a.dtype.itemsize
                            for a in (w1, b1, w2, b2, w3, b3, w4_row, b4)))

    out = pl.pallas_call(
        mlp_kernel,
        out_shape=jax.ShapeDtypeStruct((Bp, D_OUT), jnp.float32),
        grid=(n_tiles,),
        in_specs=[
            pl.BlockSpec((TM, D_IN), lambda i: (i, 0)),           # streamed x
            const(w1), const(b1),
            const(w2), const(b2),
            const(w3), const(b3),
            const(w4_row), const(b4),
        ],
        out_specs=pl.BlockSpec((TM, D_OUT), lambda i: (i, 0)),
        compiler_params=pltpu.CompilerParams(
            dimension_semantics=("parallel",)),
        cost_estimate=pl.CostEstimate(
            flops=flops, transcendentals=0, bytes_accessed=bytes_accessed),
    )(xp, w1, b1, w2, b2, w3, b3, w4_row, b4)

    return out[:B] if Bp != B else out


def init_params(key):
    """Mirror PyTorch nn.Linear default init: U(-1/sqrt(fan_in), 1/sqrt(fan_in)).
    Weights stored as (in, out) so the forward is x @ W + b."""
    dims = [(D_IN, D1), (D1, D2), (D2, D3), (D3, D_OUT)]
    params = {}
    for i, (fan_in, fan_out) in enumerate(dims, start=1):
        key, kw, kb = jax.random.split(key, 3)
        bound = 1.0 / jnp.sqrt(float(fan_in))
        params[f"w{i}"] = jax.random.uniform(
            kw, (fan_in, fan_out), jnp.float32, -bound, bound)
        params[f"b{i}"] = jax.random.uniform(
            kb, (1, fan_out), jnp.float32, -bound, bound)
    return params


def reference_forward(x, params):
    """Pure-JAX reference using the same bf16-input / f32-accumulate recipe."""
    bf16 = jnp.bfloat16
    h = jnp.dot(x.astype(bf16), params["w1"].astype(bf16),
                preferred_element_type=jnp.float32) + params["b1"]
    h = jnp.maximum(h, 0.0)
    h = jnp.dot(h.astype(bf16), params["w2"].astype(bf16),
                preferred_element_type=jnp.float32) + params["b2"]
    h = jnp.maximum(h, 0.0)
    h = jnp.dot(h.astype(bf16), params["w3"].astype(bf16),
                preferred_element_type=jnp.float32) + params["b3"]
    h = jnp.maximum(h, 0.0)
    return (jnp.sum(h * jnp.transpose(params["w4"]).astype(jnp.float32),
                    axis=-1, keepdims=True) + params["b4"])


if __name__ == "__main__":
    key = jax.random.PRNGKey(0)
    key, kx1, kx2 = jax.random.split(key, 3)
    params = init_params(key)

    # Small shape consistent with the module: (batch=8, features=30).
    x_small = jax.random.normal(kx1, (8, D_IN), jnp.float32)
    out_small = jax.block_until_ready(net_forward(x_small, params))
    ref_small = reference_forward(x_small, params)
    assert out_small.shape == (8, D_OUT), out_small.shape
    assert jnp.allclose(out_small, ref_small, atol=1e-3, rtol=1e-3)

    # Exercise the multi-tile, padded streaming path as well.
    x_big = jax.random.normal(kx2, (1000, D_IN), jnp.float32)
    out_big = jax.block_until_ready(net_forward(x_big, params, tm=256))
    ref_big = reference_forward(x_big, params)
    assert out_big.shape == (1000, D_OUT), out_big.shape
    assert jnp.allclose(out_big, ref_big, atol=1e-3, rtol=1e-3)

    print("KERNEL_OK")
</pallas_src>

<mosaic_0001>
module attributes {stable_mosaic.version = 11 : i64} {
  func.func @mlp_kernel(%arg0: i32, %arg1: memref<8x30xbf16, #tpu.memory_space<vmem>>, %arg2: memref<30x23xbf16, #tpu.memory_space<vmem>>, %arg3: memref<1x23xf32, #tpu.memory_space<vmem>>, %arg4: memref<23x15xbf16, #tpu.memory_space<vmem>>, %arg5: memref<1x15xf32, #tpu.memory_space<vmem>>, %arg6: memref<15x8xbf16, #tpu.memory_space<vmem>>, %arg7: memref<1x8xf32, #tpu.memory_space<vmem>>, %arg8: memref<1x8xf32, #tpu.memory_space<vmem>>, %arg9: memref<1x1xf32, #tpu.memory_space<vmem>>, %arg10: memref<8x1xf32, #tpu.memory_space<vmem>>) attributes {dimension_semantics = [#tpu.dimension_semantics<parallel>], iteration_bounds = array<i64: 1>, scalar_prefetch = 0 : i64, scratch_operands = 0 : i64, tpu.core_type = #tpu.core_type<tc>, window_params = [{transform_indices = @transform_0, window_bounds = array<i64: 8, 30>}, {pipeline_mode = #tpu.pipeline_mode<synchronous>, transform_indices = @transform_1, window_bounds = array<i64: 30, 23>}, {pipeline_mode = #tpu.pipeline_mode<synchronous>, transform_indices = @transform_2, window_bounds = array<i64: 1, 23>}, {pipeline_mode = #tpu.pipeline_mode<synchronous>, transform_indices = @transform_3, window_bounds = array<i64: 23, 15>}, {pipeline_mode = #tpu.pipeline_mode<synchronous>, transform_indices = @transform_4, window_bounds = array<i64: 1, 15>}, {pipeline_mode = #tpu.pipeline_mode<synchronous>, transform_indices = @transform_5, window_bounds = array<i64: 15, 8>}, {pipeline_mode = #tpu.pipeline_mode<synchronous>, transform_indices = @transform_6, window_bounds = array<i64: 1, 8>}, {pipeline_mode = #tpu.pipeline_mode<synchronous>, transform_indices = @transform_7, window_bounds = array<i64: 1, 8>}, {pipeline_mode = #tpu.pipeline_mode<synchronous>, transform_indices = @transform_8, window_bounds = array<i64: 1, 1>}, {transform_indices = @transform_9, window_bounds = array<i64: 8, 1>}]} {
    %c0 = arith.constant 0 : index
    %c0_0 = arith.constant 0 : index
    %0 = vector.load %arg1[%c0, %c0_0] : memref<8x30xbf16, #tpu.memory_space<vmem>>, vector<8x30xbf16>
    %c0_1 = arith.constant 0 : index
    %c0_2 = arith.constant 0 : index
    %1 = vector.load %arg2[%c0_1, %c0_2] : memref<30x23xbf16, #tpu.memory_space<vmem>>, vector<30x23xbf16>
    %cst = arith.constant dense<0.000000e+00> : vector<8x23xf32>
    %2 = tpu.matmul %0, %1, %cst {dimension_numbers = #tpu.dot_dimension_numbers<[1], [0], [0], [1], [0, 0, 1, 1], [], []>} : vector<8x30xbf16>, vector<30x23xbf16>, vector<8x23xf32> -> vector<8x23xf32>
    %c0_3 = arith.constant 0 : index
    %c0_4 = arith.constant 0 : index
    %3 = vector.load %arg3[%c0_3, %c0_4] : memref<1x23xf32, #tpu.memory_space<vmem>>, vector<1x23xf32>
    %4 = vector.broadcast %3 : vector<1x23xf32> to vector<8x23xf32>
    %5 = arith.addf %2, %4 : vector<8x23xf32>
    %cst_5 = arith.constant 0.000000e+00 : f32
    %6 = vector.broadcast %cst_5 : f32 to vector<8x23xf32>
    %7 = arith.maximumf %5, %6 : vector<8x23xf32>
    %8 = arith.truncf %7 : vector<8x23xf32> to vector<8x23xbf16>
    %c0_6 = arith.constant 0 : index
    %c0_7 = arith.constant 0 : index
    %9 = vector.load %arg4[%c0_6, %c0_7] : memref<23x15xbf16, #tpu.memory_space<vmem>>, vector<23x15xbf16>
    %cst_8 = arith.constant dense<0.000000e+00> : vector<8x15xf32>
    %10 = tpu.matmul %8, %9, %cst_8 {dimension_numbers = #tpu.dot_dimension_numbers<[1], [0], [0], [1], [0, 0, 1, 1], [], []>} : vector<8x23xbf16>, vector<23x15xbf16>, vector<8x15xf32> -> vector<8x15xf32>
    %c0_9 = arith.constant 0 : index
    %c0_10 = arith.constant 0 : index
    %11 = vector.load %arg5[%c0_9, %c0_10] : memref<1x15xf32, #tpu.memory_space<vmem>>, vector<1x15xf32>
    %12 = vector.broadcast %11 : vector<1x15xf32> to vector<8x15xf32>
    %13 = arith.addf %10, %12 : vector<8x15xf32>
    %cst_11 = arith.constant 0.000000e+00 : f32
    %14 = vector.broadcast %cst_11 : f32 to vector<8x15xf32>
    %15 = arith.maximumf %13, %14 : vector<8x15xf32>
    %16 = arith.truncf %15 : vector<8x15xf32> to vector<8x15xbf16>
    %c0_12 = arith.constant 0 : index
    %c0_13 = arith.constant 0 : index
    %17 = vector.load %arg6[%c0_12, %c0_13] : memref<15x8xbf16, #tpu.memory_space<vmem>>, vector<15x8xbf16>
    %cst_14 = arith.constant dense<0.000000e+00> : vector<8x8xf32>
    %18 = tpu.matmul %16, %17, %cst_14 {dimension_numbers = #tpu.dot_dimension_numbers<[1], [0], [0], [1], [0, 0, 1, 1], [], []>} : vector<8x15xbf16>, vector<15x8xbf16>, vector<8x8xf32> -> vector<8x8xf32>
    %c0_15 = arith.constant 0 : index
    %c0_16 = arith.constant 0 : index
    %19 = vector.load %arg7[%c0_15, %c0_16] : memref<1x8xf32, #tpu.memory_space<vmem>>, vector<1x8xf32>
    %20 = vector.broadcast %19 : vector<1x8xf32> to vector<8x8xf32>
    %21 = arith.addf %18, %20 : vector<8x8xf32>
    %cst_17 = arith.constant 0.000000e+00 : f32
    %22 = vector.broadcast %cst_17 : f32 to vector<8x8xf32>
    %23 = arith.maximumf %21, %22 : vector<8x8xf32>
    %c0_18 = arith.constant 0 : index
    %c0_19 = arith.constant 0 : index
    %24 = vector.load %arg8[%c0_18, %c0_19] : memref<1x8xf32, #tpu.memory_space<vmem>>, vector<1x8xf32>
    %25 = vector.broadcast %24 : vector<1x8xf32> to vector<8x8xf32>
    %26 = arith.mulf %23, %25 : vector<8x8xf32>
    %cst_20 = arith.constant dense<0.000000e+00> : vector<8xf32>
    %27 = vector.multi_reduction <add>, %26, %cst_20 [1] : vector<8x8xf32> to vector<8xf32>
    %28 = vector.shape_cast %27 : vector<8xf32> to vector<8x1xf32>
    %c0_21 = arith.constant 0 : index
    %c0_22 = arith.constant 0 : index
    %29 = vector.load %arg9[%c0_21, %c0_22] : memref<1x1xf32, #tpu.memory_space<vmem>>, vector<1x1xf32>
    %30 = vector.broadcast %29 : vector<1x1xf32> to vector<8x1xf32>
    %31 = arith.addf %28, %30 : vector<8x1xf32>
    %c0_23 = arith.constant 0 : index
    %c0_24 = arith.constant 0 : index
    %32 = vector.load %arg10[%c0_23, %c0_24] : memref<8x1xf32, #tpu.memory_space<vmem>>, vector<8x1xf32>
    tpu.vector_store %arg10[%c0_23, %c0_24], %31 {strides = array<i32>} : memref<8x1xf32, #tpu.memory_space<vmem>>, vector<8x1xf32>,
    return
  }
  func.func @transform_0(%arg0: i32) -> (i32, i32) {
    %c0_i32 = arith.constant 0 : i32
    %c0_i32_0 = arith.constant 0 : i32
    return %arg0, %c0_i32 : i32, i32
  }
  func.func @transform_1(%arg0: i32) -> (i32, i32) {
    %c0_i32 = arith.constant 0 : i32
    %c0_i32_0 = arith.constant 0 : i32
    %c0_i32_1 = arith.constant 0 : i32
    return %c0_i32, %c0_i32_0 : i32, i32
  }
  func.func @transform_2(%arg0: i32) -> (i32, i32) {
    %c0_i32 = arith.constant 0 : i32
    %c0_i32_0 = arith.constant 0 : i32
    %c0_i32_1 = arith.constant 0 : i32
    return %c0_i32, %c0_i32_0 : i32, i32
  }
  func.func @transform_3(%arg0: i32) -> (i32, i32) {
    %c0_i32 = arith.constant 0 : i32
    %c0_i32_0 = arith.constant 0 : i32
    %c0_i32_1 = arith.constant 0 : i32
    return %c0_i32, %c0_i32_0 : i32, i32
  }
  func.func @transform_4(%arg0: i32) -> (i32, i32) {
    %c0_i32 = arith.constant 0 : i32
    %c0_i32_0 = arith.constant 0 : i32
    %c0_i32_1 = arith.constant 0 : i32
    return %c0_i32, %c0_i32_0 : i32, i32
  }
  func.func @transform_5(%arg0: i32) -> (i32, i32) {
    %c0_i32 = arith.constant 0 : i32
    %c0_i32_0 = arith.constant 0 : i32
    %c0_i32_1 = arith.constant 0 : i32
    return %c0_i32, %c0_i32_0 : i32, i32
  }
  func.func @transform_6(%arg0: i32) -> (i32, i32) {
    %c0_i32 = arith.constant 0 : i32
    %c0_i32_0 = arith.constant 0 : i32
    %c0_i32_1 = arith.constant 0 : i32
    return %c0_i32, %c0_i32_0 : i32, i32
  }
  func.func @transform_7(%arg0: i32) -> (i32, i32) {
    %c0_i32 = arith.constant 0 : i32
    %c0_i32_0 = arith.constant 0 : i32
    %c0_i32_1 = arith.constant 0 : i32
    return %c0_i32, %c0_i32_0 : i32, i32
  }
  func.func @transform_8(%arg0: i32) -> (i32, i32) {
    %c0_i32 = arith.constant 0 : i32
    %c0_i32_0 = arith.constant 0 : i32
    %c0_i32_1 = arith.constant 0 : i32
    return %c0_i32, %c0_i32_0 : i32, i32
  }
  func.func @transform_9(%arg0: i32) -> (i32, i32) {
    %c0_i32 = arith.constant 0 : i32
    %c0_i32_0 = arith.constant 0 : i32
    return %arg0, %c0_i32 : i32, i32
  }
}

</mosaic_0001>

<llo_original>
// kernel: tpu_custom_call.1
$region0: #{tpu_custom_call.1}
  #allocation0 [shape = 'u32[]', space=smem, size = 0x4, offset = 0x4, fixed_abs, tag = 'smem constant byte address 0x4 - core index']
  #allocation1 [shape = 'u32[144,128]{1,0:T(1,128)}', space=vmem, size = 0x12000, scoped, tag = 'internal scratch']
  #allocation2 [shape = 'f32[1,1]{1,0:T(1,128)S(1)}', space=vmem, size = 0x200, scoped, tag = 'scoped memory for tpu_custom_call.1']
  %s0 = inlined_call_operand.vmem [shape: bf16[8,30], index: 0, kind: input, shape index: {}]
  %s1 = inlined_call_operand.vmem [shape: bf16[30,23], index: 1, kind: input, shape index: {}]
  %s2 = inlined_call_operand.vmem [shape: f32[1,23], index: 2, kind: input, shape index: {}]
  %s3 = inlined_call_operand.vmem [shape: bf16[23,15], index: 3, kind: input, shape index: {}]
  %s4 = inlined_call_operand.vmem [shape: f32[1,15], index: 4, kind: input, shape index: {}]
  %s5 = inlined_call_operand.vmem [shape: bf16[15,8], index: 5, kind: input, shape index: {}]
  %s6 = inlined_call_operand.vmem [shape: f32[1,8], index: 6, kind: input, shape index: {}]
  %s7 = inlined_call_operand.vmem [shape: f32[1,8], index: 7, kind: input, shape index: {}]
  %s8 = inlined_call_operand.<no memory space> [shape: f32[1,1], index: 8, kind: input, shape index: {}]
  %s9 = inlined_call_operand.vmem [shape: f32[8,1], index: 9, kind: output, shape index: {}]
  %s10 = sld [smem:[#allocation0]]
  $region46: #{tpu_custom_call.1} parent=0
    _
  %s12 = ssub.s32 1, %s10
  %s13 = scalar_select 0, %s12, %s10
  %v14 = vstv %s8
  %15 = vst [vmem:[#allocation2] sm:$0x1] %v14
  // Predicated region
  $region2: #{tpu_custom_call.1} parent=0 // pred_check
    _
  $region3: #{tpu_custom_call.1} parent=0 // pred_check_branch
    %17 = sbr.rel (0) target = $region5
  $region4: #{tpu_custom_call.1} parent=0 // pred_region
    _
  $region5: #{tpu_custom_call.1} parent=0 // pred_fallthru
    _
  // Predicated region
  $region6: #{tpu_custom_call.1} parent=0 // pred_check
    _
  $region7: #{tpu_custom_call.1} parent=0 // pred_check_branch
    %19 = sbr.rel (0) target = $region9
  $region8: #{tpu_custom_call.1} parent=0 // pred_region
    _
  $region9: #{tpu_custom_call.1} parent=0 // pred_fallthru
    _
  // Predicated region
  $region10: #{tpu_custom_call.1} parent=0 // pred_check
    _
  $region11: #{tpu_custom_call.1} parent=0 // pred_check_branch
    %21 = sbr.rel (0) target = $region13
  $region12: #{tpu_custom_call.1} parent=0 // pred_region
    _
  $region13: #{tpu_custom_call.1} parent=0 // pred_fallthru
    _
  // Predicated region
  $region14: #{tpu_custom_call.1} parent=0 // pred_check
    _
  $region15: #{tpu_custom_call.1} parent=0 // pred_check_branch
    %23 = sbr.rel (0) target = $region17
  $region16: #{tpu_custom_call.1} parent=0 // pred_region
    _
  $region17: #{tpu_custom_call.1} parent=0 // pred_fallthru
    _
  // Predicated region
  $region18: #{tpu_custom_call.1} parent=0 // pred_check
    _
  $region19: #{tpu_custom_call.1} parent=0 // pred_check_branch
    %25 = sbr.rel (0) target = $region21
  $region20: #{tpu_custom_call.1} parent=0 // pred_region
    _
  $region21: #{tpu_custom_call.1} parent=0 // pred_fallthru
    _
  // Predicated region
  $region22: #{tpu_custom_call.1} parent=0 // pred_check
    _
  $region23: #{tpu_custom_call.1} parent=0 // pred_check_branch
    %27 = sbr.rel (0) target = $region25
  $region24: #{tpu_custom_call.1} parent=0 // pred_region
    _
  $region25: #{tpu_custom_call.1} parent=0 // pred_fallthru
    _
  // Predicated region
  $region26: #{tpu_custom_call.1} parent=0 // pred_check
    _
  $region27: #{tpu_custom_call.1} parent=0 // pred_check_branch
    %29 = sbr.rel (0) target = $region29
  $region28: #{tpu_custom_call.1} parent=0 // pred_region
    _
  $region29: #{tpu_custom_call.1} parent=0 // pred_fallthru
    _
  // Predicated region
  $region30: #{tpu_custom_call.1} parent=0 // pred_check
    _
  $region31: #{tpu_custom_call.1} parent=0 // pred_check_branch
    %31 = sbr.rel (0) target = $region33
  $region32: #{tpu_custom_call.1} parent=0 // pred_region
    _
  $region33: #{tpu_custom_call.1} parent=0 // pred_fallthru
    _
  // Predicated region
  $region34: #{tpu_custom_call.1} parent=0 // pred_check
    _
  $region35: #{tpu_custom_call.1} parent=0 // pred_check_branch
    %33 = sbr.rel (0) target = $region37
  $region36: #{tpu_custom_call.1} parent=0 // pred_region
    _
  $region37: #{tpu_custom_call.1} parent=0 // pred_fallthru
    _
  %v35 = vld [vmem:[%s0] sm:$0xf]
  %v36 = vld [vmem:[%s1] sm:$0xf]
  %v37 = vld [vmem:[%s1 + $0x4] sm:$0xf]
  %v38 = vld [vmem:[%s1 + $0x8] sm:$0xf]
  %v39 = vld [vmem:[%s1 + $0xc] sm:$0x7]
  %v40 = vld [vmem:[%s2] sm:$0x1]
  %v42 = vlaneseq
  %v43 = vshrl.u32 %v42, 7
  %v44 = vsub.s32 0, %v43
  %v45 = vrot.slane %v40, %v44
  %v51 = vunpack.c.l.b16 %v36
  %v52 = vunpack.c.l.b16 %v37
  %v53 = vunpack.c.l.b16 %v38
  %v54 = vunpack.c.l.b16 %v39
  %v55 = vpack.c.b16 %v52, %v51
  %v56 = vpack.c.b16 %v54, %v53
  %vm58 = vcmask 244736
  %v60 = vsel %vm58, %v35, 0
  %vm62 = vcmask 1046528
  %v64 = vsel %vm62, %v56, 0
  %66 = vmatprep.subr.bf16.mxu0 0
  %67 = vmatpush1.bf16.msra.mxu0 %v55
  %68 = vmatprep.subr.bf16.mxu0 0
  %69 = vmatpush1.bf16.msra.mxu0 %v64
  %70 = vmatprep.subr.bf16.mxu0 0
  %71 = vmatpush1.bf16.msra.mxu0 0
  %72 = vmatprep.subr.bf16.mxu0 0
  %73 = vmatpush1.bf16.msra.mxu0 0
  %74 = vmatprep.subr.bf16.mxu0 0
  %75 = vmatpush1.bf16.msra.mxu0 0
  %76 = vmatprep.subr.bf16.mxu0 0
  %77 = vmatpush1.bf16.msra.mxu0 0
  %78 = vmatprep.subr.bf16.mxu0 0
  %79 = vmatpush1.bf16.msra.mxu0 0
  %80 = vmatprep.subr.bf16.mxu0 0
  %81 = vmatpush1.bf16.msra.mxu0 0
  %82 = vmatprep.subr.bf16.mxu0 0
  %83 = vmatpush1.bf16.msra.mxu0 0
  %84 = vmatprep.subr.bf16.mxu0 0
  %85 = vmatpush1.bf16.msra.mxu0 0
  %86 = vmatprep.subr.bf16.mxu0 0
  %87 = vmatpush1.bf16.msra.mxu0 0
  %88 = vmatprep.subr.bf16.mxu0 0
  %89 = vmatpush1.bf16.msra.mxu0 0
  %90 = vmatprep.subr.bf16.mxu0 0
  %91 = vmatpush1.bf16.msra.mxu0 0
  %92 = vmatprep.subr.bf16.mxu0 0
  %93 = vmatpush1.bf16.msra.mxu0 0
  %94 = vmatprep.subr.bf16.mxu0 0
  %95 = vmatpush1.bf16.msra.mxu0 0
  %96 = vmatprep.subr.bf16.mxu0 0
  %97 = vmatpush1.bf16.msra.mxu0 0
  %98 = vmatprep.mubr.bf16.mxu0 0
  %99 = vmatmul.mubr.bf16.gmra.mrb[0].mxu0 %v60
  %v100 = vpop.f32.mrb[0].mxu0
  %v101 = vadd.f32 %v45, %v100
  %v102 = vpop.f32.mrb[0].mxu0
  %v103 = vpop.f32.mrb[0].mxu0
  %v104 = vpop.f32.mrb[0].mxu0
  %105 = vdwg.mxu0
  %v106 = vmax.f32 %v101, 0.0
  %v107 = vpack.c.bf16 %v106, %v106
  %v108 = vld [vmem:[%s3] sm:$0xf]
  %v109 = vld [vmem:[%s3 + $0x4] sm:$0xf]
  %v110 = vld [vmem:[%s3 + $0x8] sm:$0xf]
  %v111 = vld [vmem:[%s4] sm:$0x1]
  %v113 = vlaneseq
  %v114 = vshrl.u32 %v113, 7
  %v115 = vsub.s32 0, %v114
  %v116 = vrot.slane %v111, %v115
  %v121 = vunpack.c.l.b16 %v108
  %v122 = vunpack.c.l.b16 %v109
  %v123 = vunpack.c.l.b16 %v110
  %v124 = vpack.c.b16 %v122, %v121
  %v125 = vpack.c.b16 %v123, %v123
  %vm127 = vcmask 187392
  %v129 = vsel %vm127, %v107, 0
  %vm131 = vcmask 1042432
  %vm132 = vcmask 1043456
  %v133 = vsel %vm131, 4294967295, 65535
  %v134 = vsel %vm132, %v133, 0
  %v136 = vand.u32 %v125, %v134
  %138 = vmatprep.subr.bf16.mxu0 0
  %139 = vmatpush1.bf16.msra.mxu0 %v124
  %140 = vmatprep.subr.bf16.mxu0 0
  %141 = vmatpush1.bf16.msra.mxu0 %v136
  %142 = vmatprep.subr.bf16.mxu0 0
  %143 = vmatpush1.bf16.msra.mxu0 0
  %144 = vmatprep.subr.bf16.mxu0 0
  %145 = vmatpush1.bf16.msra.mxu0 0
  %146 = vmatprep.subr.bf16.mxu0 0
  %147 = vmatpush1.bf16.msra.mxu0 0
  %148 = vmatprep.subr.bf16.mxu0 0
  %149 = vmatpush1.bf16.msra.mxu0 0
  %150 = vmatprep.subr.bf16.mxu0 0
  %151 = vmatpush1.bf16.msra.mxu0 0
  %152 = vmatprep.subr.bf16.mxu0 0
  %153 = vmatpush1.bf16.msra.mxu0 0
  %154 = vmatprep.subr.bf16.mxu0 0
  %155 = vmatpush1.bf16.msra.mxu0 0
  %156 = vmatprep.subr.bf16.mxu0 0
  %157 = vmatpush1.bf16.msra.mxu0 0
  %158 = vmatprep.subr.bf16.mxu0 0
  %159 = vmatpush1.bf16.msra.mxu0 0
  %160 = vmatprep.subr.bf16.mxu0 0
  %161 = vmatpush1.bf16.msra.mxu0 0
  %162 = vmatprep.subr.bf16.mxu0 0
  %163 = vmatpush1.bf16.msra.mxu0 0
  %164 = vmatprep.subr.bf16.mxu0 0
  %165 = vmatpush1.bf16.msra.mxu0 0
  %166 = vmatprep.subr.bf16.mxu0 0
  %167 = vmatpush1.bf16.msra.mxu0 0
  %168 = vmatprep.subr.bf16.mxu0 0
  %169 = vmatpush1.bf16.msra.mxu0 0
  %170 = vmatprep.mubr.bf16.mxu0 0
  %171 = vmatmul.mubr.bf16.gmra.mrb[0].mxu0 %v129
  %v172 = vpop.f32.mrb[0].mxu0
  %v173 = vadd.f32 %v116, %v172
  %v174 = vpop.f32.mrb[0].mxu0
  %v175 = vpop.f32.mrb[0].mxu0
  %v176 = vpop.f32.mrb[0].mxu0
  %177 = vdwg.mxu0
  %v178 = vmax.f32 %v173, 0.0
  %v179 = vpack.c.bf16 %v178, %v178
  %v180 = vld [vmem:[%s5] sm:$0xf]
  %v181 = vld [vmem:[%s5 + $0x4] sm:$0xf]
  %v182 = vld [vmem:[%s6] sm:$0x1]
  %v184 = vlaneseq
  %v185 = vshrl.u32 %v184, 7
  %v186 = vsub.s32 0, %v185
  %v187 = vrot.slane %v182, %v186
  %v191 = vunpack.c.l.b16 %v180
  %v192 = vunpack.c.l.b16 %v181
  %v193 = vpack.c.b16 %v192, %v191
  %vm194 = vcmask 121856
  %v196 = vsel %vm194, %v179, 0
  %vm198 = vcmask 1047552
  %v199 = vsel %vm62, 4294967295, 65535
  %v200 = vsel %vm198, %v199, 0
  %v202 = vand.u32 %v193, %v200
  %204 = vmatprep.subr.bf16.mxu0 0
  %205 = vmatpush1.bf16.msra.mxu0 %v202
  %206 = vmatprep.subr.bf16.mxu0 0
  %207 = vmatpush1.bf16.msra.mxu0 0
  %208 = vmatprep.subr.bf16.mxu0 0
  %209 = vmatpush1.bf16.msra.mxu0 0
  %210 = vmatprep.subr.bf16.mxu0 0
  %211 = vmatpush1.bf16.msra.mxu0 0
  %212 = vmatprep.subr.bf16.mxu0 0
  %213 = vmatpush1.bf16.msra.mxu0 0
  %214 = vmatprep.subr.bf16.mxu0 0
  %215 = vmatpush1.bf16.msra.mxu0 0
  %216 = vmatprep.subr.bf16.mxu0 0
  %217 = vmatpush1.bf16.msra.mxu0 0
  %218 = vmatprep.subr.bf16.mxu0 0
  %219 = vmatpush1.bf16.msra.mxu0 0
  %220 = vmatprep.subr.bf16.mxu0 0
  %221 = vmatpush1.bf16.msra.mxu0 0
  %222 = vmatprep.subr.bf16.mxu0 0
  %223 = vmatpush1.bf16.msra.mxu0 0
  %224 = vmatprep.subr.bf16.mxu0 0
  %225 = vmatpush1.bf16.msra.mxu0 0
  %226 = vmatprep.subr.bf16.mxu0 0
  %227 = vmatpush1.bf16.msra.mxu0 0
  %228 = vmatprep.subr.bf16.mxu0 0
  %229 = vmatpush1.bf16.msra.mxu0 0
  %230 = vmatprep.subr.bf16.mxu0 0
  %231 = vmatpush1.bf16.msra.mxu0 0
  %232 = vmatprep.subr.bf16.mxu0 0
  %233 = vmatpush1.bf16.msra.mxu0 0
  %234 = vmatprep.subr.bf16.mxu0 0
  %235 = vmatpush1.bf16.msra.mxu0 0
  %236 = vmatprep.mubr.bf16.mxu0 0
  %237 = vmatmul.mubr.bf16.gmra.mrb[0].mxu0 %v196
  %v238 = vpop.f32.mrb[0].mxu0
  %v239 = vadd.f32 %v187, %v238
  %v240 = vpop.f32.mrb[0].mxu0
  %v241 = vpop.f32.mrb[0].mxu0
  %v242 = vpop.f32.mrb[0].mxu0
  %243 = vdwg.mxu0
  %v244 = vmax.f32 %v239, 0.0
  %v245 = vld [vmem:[%s7] sm:$0x1]
  %v247 = vlaneseq
  %v248 = vshrl.u32 %v247, 7
  %v249 = vsub.s32 0, %v248
  %v250 = vrot.slane %v245, %v249
  %v252 = vmul.f32 %v244, %v250
  %vm253 = vcmask 64512
  %v254 = vsel %vm253, %v252, 0.0
  %255 = vadd.xlane.f32.xlu0 %v254
  %v256 = vpop.xlane.xlu0 %255
  %v257 = vld [vmem:[#allocation2] sm:$0x1]
  %v259 = vlaneseq
  %v260 = vshrl.u32 %v259, 7
  %v261 = vsub.s32 0, %v260
  %v262 = vrot.slane %v257, %v261
  %v264 = vadd.f32 %v256, %v262
  %vm265 = vcmask 7168
  %266 = vst.msk [vmem:[%s9] sm:$0xff] %vm265, %v264
  // Predicated region
  $region38: #{tpu_custom_call.1} parent=0 // pred_check
    _
  $region39: #{tpu_custom_call.1} parent=0 // pred_check_branch
    %268 = sbr.rel (0) target = $region41
  $region40: #{tpu_custom_call.1} parent=0 // pred_region
    _
  $region41: #{tpu_custom_call.1} parent=0 // pred_fallthru
    _
  // Predicated region
  $region42: #{tpu_custom_call.1} parent=0 // pred_check
    _
  $region43: #{tpu_custom_call.1} parent=0 // pred_check_branch
    %270 = sbr.rel (0) target = $region45
  $region44: #{tpu_custom_call.1} parent=0 // pred_region
    _
  $region45: #{tpu_custom_call.1} parent=0 // pred_fallthru
    _

</llo_original>
